<compile_context>
chip_gen: v7x
topology: tpu7x:2x2x1
jax: 0.10.0
libtpu: 0.0.40
codegen_flags: <defaults>
</compile_context>

<pallas_src>
import functools

import jax
import jax.numpy as jnp
from jax.experimental import pallas as pl
from jax.experimental.pallas import tpu as pltpu


def _round_up(v, m):
    return ((v + m - 1) // m) * m


def _vmem_limit_bytes():
    """Per-generation VMEM budget: ~96 MiB on 128-MiB chips (v5e/v6e), ~48 MiB on v7x."""
    cap = 128 * 1024 * 1024
    try:
        info = pltpu.get_tpu_info()
        cap = int(getattr(info, "vmem_capacity_bytes", cap) or cap)
    except Exception:
        pass
    # Leave ~25% headroom for compiler-internal scratch; never ask for more than 100 MiB.
    return int(min(cap * 3 // 4, 100 * 1024 * 1024))


def _apply_act(h, activation):
    if activation == "relu":
        return jnp.maximum(h, 0.0)
    # Exact erf GELU: matches PyTorch nn.GELU() default.
    return jax.nn.gelu(h, approximate=False)


# ----------------------------------------------------------------------------- kernels

def ffn_kernel_resident(x_ref, w1_ref, b1_ref, w2_ref, b2_ref, o_ref, *, activation):
    """Weights fully VMEM-resident: one fused MLP per row tile, no inner grid axis."""
    x = x_ref[...]
    h = jnp.dot(x, w1_ref[...], preferred_element_type=jnp.float32) + b1_ref[...]
    h = _apply_act(h, activation)
    y = jnp.dot(h.astype(w2_ref.dtype), w2_ref[...], preferred_element_type=jnp.float32)
    y = y + b2_ref[...] + x.astype(jnp.float32)          # bias + residual
    o_ref[...] = y.astype(o_ref.dtype)


def ffn_kernel_stream(x_ref, w1_ref, b1_ref, w2_ref, b2_ref, o_ref, *scratch, activation):
    """Inner dim streamed over grid axis 1; accumulate into o_ref (f32 out) or scratch."""
    acc_ref = scratch[0] if scratch else o_ref
    k = pl.program_id(1)

    @pl.when(k == 0)
    def _():
        acc_ref[...] = jnp.zeros_like(acc_ref)

    x = x_ref[...]
    h = jnp.dot(x, w1_ref[...], preferred_element_type=jnp.float32) + b1_ref[...]
    h = _apply_act(h, activation)       # elementwise over inner -> exact per inner-tile
    acc_ref[...] += jnp.dot(
        h.astype(w2_ref.dtype), w2_ref[...], preferred_element_type=jnp.float32
    ).astype(acc_ref.dtype)

    @pl.when(k == pl.num_programs(1) - 1)
    def _():
        y = acc_ref[...].astype(jnp.float32) + b2_ref[...] + x_ref[...].astype(jnp.float32)
        o_ref[...] = y.astype(o_ref.dtype)


# ----------------------------------------------------------------------------- wrapper

def feed_forward(x, w1, b1, w2, b2, *, activation="relu", tm=512, tk=512,
                 max_resident_bytes=None):
    """x: (B, L, d_model); w1: (d_model, inner); b1: (inner,);
       w2: (inner, d_model); b2: (d_model,). Returns (B, L, d_model).

    tm: desired row tile over flattened B*L (auto-shrunk to fit the VMEM budget).
    tk: inner-dim tile used only on the streaming path.
    max_resident_bytes: override for the resident-weights decision (testing)."""
    B, L, D = x.shape
    inner = w1.shape[1]
    M = B * L

    # Pin MXU operand dtypes: both matmul operands share x.dtype (bf16 stays bf16),
    # biases stay f32 (added in the f32 accumulation domain).
    w_dtype = x.dtype
    w1 = w1.astype(w_dtype)
    w2 = w2.astype(w_dtype)
    b1 = b1.astype(jnp.float32)
    b2 = b2.astype(jnp.float32)

    xsize = jnp.dtype(x.dtype).itemsize
    wsize = jnp.dtype(w_dtype).itemsize

    Dp = _round_up(D, 128)
    Kp = _round_up(inner, 128)
    row_limit = _round_up(M, 8)

    budget = _vmem_limit_bytes()
    resident_budget = budget if max_resident_bytes is None else max_resident_bytes

    # --- residency decision: both padded weights, double-buffered, must fit VMEM ---
    weight_fp = 2 * (Dp * Kp + Kp * Dp) * wsize + 2 * 4 * (Kp + Dp)
    per_row_res = 4 * Dp * xsize                       # x block + out block, x2 buffers
    tm_budget_res = 0
    if resident_budget > weight_fp:
        tm_budget_res = ((resident_budget - weight_fp) // per_row_res // 8) * 8
    resident = tm_budget_res >= min(256, row_limit)

    if resident:
        Kp_used = Kp
        TM = max(8, min(_round_up(tm, 8), tm_budget_res, row_limit))
        Mp = _round_up(M, TM)
        grid = (Mp // TM,)
        TK = Kp_used
    else:
        TK = min(_round_up(tk, 128), Kp)
        Kp_used = _round_up(inner, TK)
        use_scratch = x.dtype != jnp.float32
        weight_blk = 2 * (Dp * TK + TK * Dp) * wsize + 2 * 4 * (TK + Dp)
        per_row_s = 4 * Dp * xsize + (4 * Dp if use_scratch else 0)
        tm_budget_s = 8
        if budget > weight_blk:
            tm_budget_s = max(8, ((budget - weight_blk) // per_row_s // 8) * 8)
        TM = max(8, min(_round_up(tm, 8), tm_budget_s, row_limit))
        Mp = _round_up(M, TM)
        grid = (Mp // TM, Kp_used // TK)

    # --- padding (only when needed; padding is exact: zero weight/bias cols -> zeros) ---
    x2 = x.reshape(M, D)
    padded_x = (Mp != M) or (Dp != D)
    if padded_x:
        x2 = jnp.pad(x2, ((0, Mp - M), (0, Dp - D)))
    if (Dp != D) or (Kp_used != inner):
        w1 = jnp.pad(w1, ((0, Dp - D), (0, Kp_used - inner)))
        w2 = jnp.pad(w2, ((0, Kp_used - inner), (0, Dp - D)))
        b1 = jnp.pad(b1, (0, Kp_used - inner))
        b2 = jnp.pad(b2, (0, Dp - D))
    b1 = b1.reshape(1, Kp_used)
    b2 = b2.reshape(1, Dp)

    # --- cost hint (advisory): real weight traffic depends on residency ---
    n_row_tiles = Mp // TM
    weight_bytes = 2 * Dp * Kp_used * wsize
    cost = pl.CostEstimate(
        flops=4 * Mp * Dp * Kp_used,
        transcendentals=(Mp * Kp_used if activation == "gelu" else 0),
        bytes_accessed=int(2 * Mp * Dp * xsize
                           + (weight_bytes if resident else weight_bytes * n_row_tiles)),
    )

    if resident:
        out_p = pl.pallas_call(
            functools.partial(ffn_kernel_resident, activation=activation),
            out_shape=jax.ShapeDtypeStruct((Mp, Dp), x.dtype),
            grid_spec=pltpu.PrefetchScalarGridSpec(
                num_scalar_prefetch=0,
                grid=grid,
                in_specs=[
                    pl.BlockSpec((TM, Dp), lambda i: (i, 0)),        # x rows
                    pl.BlockSpec((Dp, Kp_used), lambda i: (0, 0)),   # w1 (resident)
                    pl.BlockSpec((1, Kp_used), lambda i: (0, 0)),    # b1 (resident)
                    pl.BlockSpec((Kp_used, Dp), lambda i: (0, 0)),   # w2 (resident)
                    pl.BlockSpec((1, Dp), lambda i: (0, 0)),         # b2 (resident)
                ],
                out_specs=pl.BlockSpec((TM, Dp), lambda i: (i, 0)),
                scratch_shapes=[],
            ),
            compiler_params=pltpu.CompilerParams(
                dimension_semantics=("parallel",),
                vmem_limit_bytes=budget,
            ),
            cost_estimate=cost,
        )(x2, w1, b1, w2, b2)
    else:
        scratch = [] if x.dtype == jnp.float32 else [pltpu.VMEM((TM, Dp), jnp.float32)]
        out_p = pl.pallas_call(
            functools.partial(ffn_kernel_stream, activation=activation),
            out_shape=jax.ShapeDtypeStruct((Mp, Dp), x.dtype),
            grid_spec=pltpu.PrefetchScalarGridSpec(
                num_scalar_prefetch=0,
                grid=grid,
                in_specs=[
                    pl.BlockSpec((TM, Dp), lambda i, k: (i, 0)),     # x rows (resident over k)
                    pl.BlockSpec((Dp, TK), lambda i, k: (0, k)),     # w1 inner tile
                    pl.BlockSpec((1, TK), lambda i, k: (0, k)),      # b1 inner tile
                    pl.BlockSpec((TK, Dp), lambda i, k: (k, 0)),     # w2 inner tile
                    pl.BlockSpec((1, Dp), lambda i, k: (0, 0)),      # b2 (resident)
                ],
                out_specs=pl.BlockSpec((TM, Dp), lambda i, k: (i, 0)),
                scratch_shapes=scratch,
            ),
            compiler_params=pltpu.CompilerParams(
                dimension_semantics=("parallel", "arbitrary"),
                vmem_limit_bytes=budget,
            ),
            cost_estimate=cost,
        )(x2, w1, b1, w2, b2)

    if padded_x:
        out_p = out_p[:M, :D]
    return out_p.reshape(B, L, D)


# ----------------------------------------------------------------------------- reference

def feed_forward_ref(x, w1, b1, w2, b2, activation="relu"):
    """Plain-JAX reference mirroring the PyTorch forward (eval mode)."""
    h = jnp.einsum("bld,di->bli", x, w1) + b1
    h = jnp.maximum(h, 0.0) if activation == "relu" else jax.nn.gelu(h, approximate=False)
    y = jnp.einsum("bli,id->bld", h, w2) + b2
    return x + y


def _make_params(key, d_model, inner):
    kw1, kw2 = jax.random.split(key, 2)
    # Conv1d(kernel_size=1) weights in squeezed/transposed (in, out) matmul form.
    # Biases are zero (as in _init_weights); weights kaiming-uniform-like.
    bound1 = 1.0 / (d_model ** 0.5)
    bound2 = 1.0 / (inner ** 0.5)
    w1 = jax.random.uniform(kw1, (d_model, inner), jnp.float32, -bound1, bound1)
    b1 = jnp.zeros((inner,), jnp.float32)
    w2 = jax.random.uniform(kw2, (inner, d_model), jnp.float32, -bound2, bound2)
    b2 = jnp.zeros((d_model,), jnp.float32)
    return w1, b1, w2, b2


if __name__ == "__main__":
    key = jax.random.PRNGKey(0)
    k1, k2, k3, k4 = jax.random.split(key, 4)

    # Test 1: aligned shapes, relu, resident-weight path.
    B, L, D, INNER = 2, 16, 32, 64
    x = jax.random.normal(k1, (B, L, D), dtype=jnp.float32)
    w1, b1, w2, b2 = _make_params(k2, D, INNER)
    out = jax.block_until_ready(feed_forward(x, w1, b1, w2, b2, activation="relu"))
    ref = feed_forward_ref(x, w1, b1, w2, b2, activation="relu")
    assert out.shape == (B, L, D)
    assert jnp.allclose(out, ref, atol=1e-4, rtol=1e-4), "mismatch vs reference (test 1)"

    # Test 2: ragged shapes + exact-erf gelu, exercising the padding path.
    B2, L2, D2, INNER2 = 2, 10, 48, 100
    x2 = jax.random.normal(k3, (B2, L2, D2), dtype=jnp.float32)
    w1b, b1b, w2b, b2b = _make_params(k4, D2, INNER2)
    out2 = jax.block_until_ready(feed_forward(x2, w1b, b1b, w2b, b2b, activation="gelu"))
    ref2 = feed_forward_ref(x2, w1b, b1b, w2b, b2b, activation="gelu")
    assert out2.shape == (B2, L2, D2)
    assert jnp.allclose(out2, ref2, atol=1e-4, rtol=1e-4), "mismatch vs reference (test 2)"

    # Test 3: force the weight-streaming (inner grid axis) path.
    out3 = jax.block_until_ready(
        feed_forward(x, w1, b1, w2, b2, activation="relu", max_resident_bytes=0))
    assert jnp.allclose(out3, ref, atol=1e-4, rtol=1e-4), "mismatch vs reference (test 3)"

    print("KERNEL_OK")
</pallas_src>

<mosaic_0001>
module attributes {stable_mosaic.version = 11 : i64} {
  func.func @ffn_kernel_resident(%arg0: i32, %arg1: memref<32x128xf32, #tpu.memory_space<vmem>>, %arg2: memref<128x128xf32, #tpu.memory_space<vmem>>, %arg3: memref<1x128xf32, #tpu.memory_space<vmem>>, %arg4: memref<128x128xf32, #tpu.memory_space<vmem>>, %arg5: memref<1x128xf32, #tpu.memory_space<vmem>>, %arg6: memref<32x128xf32, #tpu.memory_space<vmem>>) attributes {dimension_semantics = [#tpu.dimension_semantics<parallel>], iteration_bounds = array<i64: 1>, scalar_prefetch = 0 : i64, scratch_operands = 0 : i64, tpu.core_type = #tpu.core_type<tc>, window_params = [{transform_indices = @transform_0, window_bounds = array<i64: 32, 128>}, {pipeline_mode = #tpu.pipeline_mode<synchronous>, transform_indices = @transform_1, window_bounds = array<i64: 128, 128>}, {pipeline_mode = #tpu.pipeline_mode<synchronous>, transform_indices = @transform_2, window_bounds = array<i64: 1, 128>}, {pipeline_mode = #tpu.pipeline_mode<synchronous>, transform_indices = @transform_3, window_bounds = array<i64: 128, 128>}, {pipeline_mode = #tpu.pipeline_mode<synchronous>, transform_indices = @transform_4, window_bounds = array<i64: 1, 128>}, {transform_indices = @transform_5, window_bounds = array<i64: 32, 128>}]} {
    %c0 = arith.constant 0 : index
    %c0_0 = arith.constant 0 : index
    %0 = vector.load %arg1[%c0, %c0_0] : memref<32x128xf32, #tpu.memory_space<vmem>>, vector<32x128xf32>
    %c0_1 = arith.constant 0 : index
    %c0_2 = arith.constant 0 : index
    %1 = vector.load %arg2[%c0_1, %c0_2] : memref<128x128xf32, #tpu.memory_space<vmem>>, vector<128x128xf32>
    %cst = arith.constant dense<0.000000e+00> : vector<32x128xf32>
    %2 = tpu.matmul %0, %1, %cst {dimension_numbers = #tpu.dot_dimension_numbers<[1], [0], [0], [1], [0, 0, 1, 1], [], []>} : vector<32x128xf32>, vector<128x128xf32>, vector<32x128xf32> -> vector<32x128xf32>
    %c0_3 = arith.constant 0 : index
    %c0_4 = arith.constant 0 : index
    %3 = vector.load %arg3[%c0_3, %c0_4] : memref<1x128xf32, #tpu.memory_space<vmem>>, vector<1x128xf32>
    %4 = vector.broadcast %3 : vector<1x128xf32> to vector<32x128xf32>
    %5 = arith.addf %2, %4 : vector<32x128xf32>
    %cst_5 = arith.constant 0.000000e+00 : f32
    %6 = vector.broadcast %cst_5 : f32 to vector<32x128xf32>
    %7 = arith.maximumf %5, %6 : vector<32x128xf32>
    %c0_6 = arith.constant 0 : index
    %c0_7 = arith.constant 0 : index
    %8 = vector.load %arg4[%c0_6, %c0_7] : memref<128x128xf32, #tpu.memory_space<vmem>>, vector<128x128xf32>
    %cst_8 = arith.constant dense<0.000000e+00> : vector<32x128xf32>
    %9 = tpu.matmul %7, %8, %cst_8 {dimension_numbers = #tpu.dot_dimension_numbers<[1], [0], [0], [1], [0, 0, 1, 1], [], []>} : vector<32x128xf32>, vector<128x128xf32>, vector<32x128xf32> -> vector<32x128xf32>
    %c0_9 = arith.constant 0 : index
    %c0_10 = arith.constant 0 : index
    %10 = vector.load %arg5[%c0_9, %c0_10] : memref<1x128xf32, #tpu.memory_space<vmem>>, vector<1x128xf32>
    %11 = vector.broadcast %10 : vector<1x128xf32> to vector<32x128xf32>
    %12 = arith.addf %9, %11 : vector<32x128xf32>
    %13 = arith.addf %12, %0 : vector<32x128xf32>
    %c0_11 = arith.constant 0 : index
    %c0_12 = arith.constant 0 : index
    %14 = vector.load %arg6[%c0_11, %c0_12] : memref<32x128xf32, #tpu.memory_space<vmem>>, vector<32x128xf32>
    tpu.vector_store %arg6[%c0_11, %c0_12], %13 {strides = array<i32>} : memref<32x128xf32, #tpu.memory_space<vmem>>, vector<32x128xf32>,
    return
  }
  func.func @transform_0(%arg0: i32) -> (i32, i32) {
    %c0_i32 = arith.constant 0 : i32
    %c0_i32_0 = arith.constant 0 : i32
    return %arg0, %c0_i32 : i32, i32
  }
  func.func @transform_1(%arg0: i32) -> (i32, i32) {
    %c0_i32 = arith.constant 0 : i32
    %c0_i32_0 = arith.constant 0 : i32
    %c0_i32_1 = arith.constant 0 : i32
    return %c0_i32, %c0_i32_0 : i32, i32
  }
  func.func @transform_2(%arg0: i32) -> (i32, i32) {
    %c0_i32 = arith.constant 0 : i32
    %c0_i32_0 = arith.constant 0 : i32
    %c0_i32_1 = arith.constant 0 : i32
    return %c0_i32, %c0_i32_0 : i32, i32
  }
  func.func @transform_3(%arg0: i32) -> (i32, i32) {
    %c0_i32 = arith.constant 0 : i32
    %c0_i32_0 = arith.constant 0 : i32
    %c0_i32_1 = arith.constant 0 : i32
    return %c0_i32, %c0_i32_0 : i32, i32
  }
  func.func @transform_4(%arg0: i32) -> (i32, i32) {
    %c0_i32 = arith.constant 0 : i32
    %c0_i32_0 = arith.constant 0 : i32
    %c0_i32_1 = arith.constant 0 : i32
    return %c0_i32, %c0_i32_0 : i32, i32
  }
  func.func @transform_5(%arg0: i32) -> (i32, i32) {
    %c0_i32 = arith.constant 0 : i32
    %c0_i32_0 = arith.constant 0 : i32
    return %arg0, %c0_i32 : i32, i32
  }
}

</mosaic_0001>

<llo_original>
// kernel: tpu_custom_call.1
$region0: #{tpu_custom_call.1}
  #allocation0 [shape = 'u32[]', space=smem, size = 0x4, offset = 0x4, fixed_abs, tag = 'smem constant byte address 0x4 - core index']
  #allocation1 [shape = 'u32[144,128]{1,0:T(1,128)}', space=vmem, size = 0x12000, scoped, tag = 'internal scratch']
  %s0 = inlined_call_operand.hbm [shape: f32[32,128], index: 0, kind: input, shape index: {}]
  %s1 = inlined_call_operand.hbm [shape: f32[128,128], index: 1, kind: input, shape index: {}]
  %s2 = inlined_call_operand.hbm [shape: f32[1,128], index: 2, kind: input, shape index: {}]
  %s3 = inlined_call_operand.hbm [shape: f32[128,128], index: 3, kind: input, shape index: {}]
  %s4 = inlined_call_operand.hbm [shape: f32[1,128], index: 4, kind: input, shape index: {}]
  %s5 = inlined_call_operand.hbm [shape: f32[32,128], index: 5, kind: output, shape index: {}]
  %s6 = sld [smem:[#allocation0]]
  $region50: #{tpu_custom_call.1} parent=0
    _
  %s8 = ssub.s32 1, %s6
  %s9 = scalar_select 0, %s8, %s6
  $region1: #{tpu_custom_call.1} parent=0
    #allocation2 [shape = 'u8[16384]{0}', space=vmem, size = 0x4000, scoped, tag = 'input window, operand 0, single buffered']
    #allocation3 [shape = 's32[1]{0}', space=sflag, size = 0x4, scoped, tag = 'scoped memory for tpu_custom_call.1']
    #allocation4 [shape = 's32[1]{0}', space=sflag, size = 0x4, scoped, tag = 'scoped memory for tpu_custom_call.1']
    #allocation5 [shape = 'u8[65536]{0}', space=vmem, size = 0x10000, scoped, tag = 'input window, operand 1, single buffered']
    #allocation6 [shape = 's32[1]{0}', space=sflag, size = 0x4, scoped, tag = 'scoped memory for tpu_custom_call.1']
    #allocation7 [shape = 'u8[512]{0}', space=vmem, size = 0x400, scoped, tag = 'input window, operand 2, single buffered']
    #allocation8 [shape = 'u8[65536]{0}', space=vmem, size = 0x10000, scoped, tag = 'input window, operand 3, single buffered']
    #allocation9 [shape = 's32[1]{0}', space=sflag, size = 0x4, scoped, tag = 'scoped memory for tpu_custom_call.1']
    #allocation10 [shape = 'u8[512]{0}', space=vmem, size = 0x400, scoped, tag = 'input window, operand 4, single buffered']
    #allocation11 [shape = 'u8[16384]{0}', space=vmem, size = 0x4000, scoped, tag = 'output window, operand 0, single buffered']
    %10 = vsyncpa [#allocation3], 0
    %11 = vsyncpa [#allocation6], 0
    %12 = vsyncpa [#allocation9], 0
    %13 = vsyncpa [#allocation4], 0
    // Predicated region
    $region2: #{tpu_custom_call.1} parent=1 // pred_check
      _
    $region3: #{tpu_custom_call.1} parent=1 // pred_check_branch
      %15 = sbr.rel (0) target = $region5
    $region4: #{tpu_custom_call.1} parent=1 // pred_region
      %s17 = ssub.s32 512, 512
      %18 = vsyncadd [#allocation3], %s17
      %s19 = sshll.u32 [#allocation2], 4
      %s20 = int_to_ptr.vmem [resolvable:$true] %s19
      %25 = dma.hbm_to_vmem [thread:$0]  %s0, 512, %s20, [#allocation3], 128, 128, 8
    $region5: #{tpu_custom_call.1} parent=1 // pred_fallthru
      _
    // Predicated region
    $region6: #{tpu_custom_call.1} parent=1 // pred_check
      _
    $region7: #{tpu_custom_call.1} parent=1 // pred_check_branch
      %27 = sbr.rel (0) target = $region9
    $region8: #{tpu_custom_call.1} parent=1 // pred_region
      %s29 = ssub.s32 2048, 2048
      %30 = vsyncadd [#allocation6], %s29
      %s31 = sshll.u32 [#allocation5], 4
      %s32 = int_to_ptr.vmem [resolvable:$true] %s31
      %37 = dma.hbm_to_vmem [thread:$0]  %s1, 2048, %s32, [#allocation6], 128, 128, 8
    $region9: #{tpu_custom_call.1} parent=1 // pred_fallthru
      _
    // Predicated region
    $region10: #{tpu_custom_call.1} parent=1 // pred_check
      _
    $region11: #{tpu_custom_call.1} parent=1 // pred_check_branch
      %39 = sbr.rel (0) target = $region13
    $region12: #{tpu_custom_call.1} parent=1 // pred_region
      %s41 = ssub.s32 16, 16
      %42 = vsyncadd [#allocation6], %s41
      %s44 = sshll.u32 [#allocation7], 4
      %s45 = int_to_ptr.vmem [resolvable:$true] %s44
      %47 = dma.hbm_to_vmem [thread:$0]  %s2, 16, %s45, [#allocation6]
    $region13: #{tpu_custom_call.1} parent=1 // pred_fallthru
      _
    // Predicated region
    $region14: #{tpu_custom_call.1} parent=1 // pred_check
      _
    $region15: #{tpu_custom_call.1} parent=1 // pred_check_branch
      %49 = sbr.rel (0) target = $region17
    $region16: #{tpu_custom_call.1} parent=1 // pred_region
      %s51 = ssub.s32 2048, 2048
      %52 = vsyncadd [#allocation9], %s51
      %s53 = sshll.u32 [#allocation8], 4
      %s54 = int_to_ptr.vmem [resolvable:$true] %s53
      %59 = dma.hbm_to_vmem [thread:$0]  %s3, 2048, %s54, [#allocation9], 128, 128, 8
    $region17: #{tpu_custom_call.1} parent=1 // pred_fallthru
      _
    // Predicated region
    $region18: #{tpu_custom_call.1} parent=1 // pred_check
      _
    $region19: #{tpu_custom_call.1} parent=1 // pred_check_branch
      %61 = sbr.rel (0) target = $region21
    $region20: #{tpu_custom_call.1} parent=1 // pred_region
      %s63 = ssub.s32 16, 16
      %64 = vsyncadd [#allocation9], %s63
      %s66 = sshll.u32 [#allocation10], 4
      %s67 = int_to_ptr.vmem [resolvable:$true] %s66
      %69 = dma.hbm_to_vmem [thread:$0]  %s4, 16, %s67, [#allocation9]
    $region21: #{tpu_custom_call.1} parent=1 // pred_fallthru
      _
    // Predicated region
    $region22: #{tpu_custom_call.1} parent=1 // pred_check
      _
    $region23: #{tpu_custom_call.1} parent=1 // pred_check_branch
      %71 = sbr.rel (0) target = $region25
    $region24: #{tpu_custom_call.1} parent=1 // pred_region
      %72 = dma.done [#allocation3], 512
    $region25: #{tpu_custom_call.1} parent=1 // pred_fallthru
      _
    // Predicated region
    $region26: #{tpu_custom_call.1} parent=1 // pred_check
      _
    $region27: #{tpu_custom_call.1} parent=1 // pred_check_branch
      %74 = sbr.rel (0) target = $region29
    $region28: #{tpu_custom_call.1} parent=1 // pred_region
      %75 = dma.done [#allocation6], 2048
    $region29: #{tpu_custom_call.1} parent=1 // pred_fallthru
      _
    // Predicated region
    $region30: #{tpu_custom_call.1} parent=1 // pred_check
      _
    $region31: #{tpu_custom_call.1} parent=1 // pred_check_branch
      %77 = sbr.rel (0) target = $region33
    $region32: #{tpu_custom_call.1} parent=1 // pred_region
      %78 = dma.done [#allocation6], 16
    $region33: #{tpu_custom_call.1} parent=1 // pred_fallthru
      _
    // Predicated region
    $region34: #{tpu_custom_call.1} parent=1 // pred_check
      _
    $region35: #{tpu_custom_call.1} parent=1 // pred_check_branch
      %80 = sbr.rel (0) target = $region37
    $region36: #{tpu_custom_call.1} parent=1 // pred_region
      %81 = dma.done [#allocation9], 2048
    $region37: #{tpu_custom_call.1} parent=1 // pred_fallthru
      _
    // Predicated region
    $region38: #{tpu_custom_call.1} parent=1 // pred_check
      _
    $region39: #{tpu_custom_call.1} parent=1 // pred_check_branch
      %83 = sbr.rel (0) target = $region41
    $region40: #{tpu_custom_call.1} parent=1 // pred_region
      %84 = dma.done [#allocation9], 16
    $region41: #{tpu_custom_call.1} parent=1 // pred_fallthru
      _
    %v85 = vld [vmem:[#allocation2] sm:$0xff]
    %v86 = vld [vmem:[#allocation2 + $0x8] sm:$0xff]
    %v87 = vld [vmem:[#allocation2 + $0x10] sm:$0xff]
    %v88 = vld [vmem:[#allocation2 + $0x18] sm:$0xff]
    %v89 = vld [vmem:[#allocation5] sm:$0xff]
    %v90 = vld [vmem:[#allocation5 + $0x8] sm:$0xff]
    %v91 = vld [vmem:[#allocation5 + $0x10] sm:$0xff]
    %v92 = vld [vmem:[#allocation5 + $0x18] sm:$0xff]
    %v93 = vld [vmem:[#allocation5 + $0x20] sm:$0xff]
    %v94 = vld [vmem:[#allocation5 + $0x28] sm:$0xff]
    %v95 = vld [vmem:[#allocation5 + $0x30] sm:$0xff]
    %v96 = vld [vmem:[#allocation5 + $0x38] sm:$0xff]
    %v97 = vld [vmem:[#allocation5 + $0x40] sm:$0xff]
    %v98 = vld [vmem:[#allocation5 + $0x48] sm:$0xff]
    %v99 = vld [vmem:[#allocation5 + $0x50] sm:$0xff]
    %v100 = vld [vmem:[#allocation5 + $0x58] sm:$0xff]
    %v101 = vld [vmem:[#allocation5 + $0x60] sm:$0xff]
    %v102 = vld [vmem:[#allocation5 + $0x68] sm:$0xff]
    %v103 = vld [vmem:[#allocation5 + $0x70] sm:$0xff]
    %v104 = vld [vmem:[#allocation5 + $0x78] sm:$0xff]
    %v105 = vld [vmem:[#allocation7] sm:$0x1]
    %v107 = vlaneseq
    %v108 = vshrl.u32 %v107, 7
    %v109 = vsub.s32 0, %v108
    %v110 = vrot.slane %v105, %v109
    %112 = vmatprep.subr.mxu0 0.0
    %113 = vmatpush1.msra.mxu0 %v89
    %114 = vmatprep.subr.mxu0 0.0
    %115 = vmatpush1.msra.mxu0 %v90
    %116 = vmatprep.subr.mxu0 0.0
    %117 = vmatpush1.msra.mxu0 %v91
    %118 = vmatprep.subr.mxu0 0.0
    %119 = vmatpush1.msra.mxu0 %v92
    %120 = vmatprep.subr.mxu0 0.0
    %121 = vmatpush1.msra.mxu0 %v93
    %122 = vmatprep.subr.mxu0 0.0
    %123 = vmatpush1.msra.mxu0 %v94
    %124 = vmatprep.subr.mxu0 0.0
    %125 = vmatpush1.msra.mxu0 %v95
    %126 = vmatprep.subr.mxu0 0.0
    %127 = vmatpush1.msra.mxu0 %v96
    %128 = vmatprep.subr.mxu0 0.0
    %129 = vmatpush1.msra.mxu0 %v97
    %130 = vmatprep.subr.mxu0 0.0
    %131 = vmatpush1.msra.mxu0 %v98
    %132 = vmatprep.subr.mxu0 0.0
    %133 = vmatpush1.msra.mxu0 %v99
    %134 = vmatprep.subr.mxu0 0.0
    %135 = vmatpush1.msra.mxu0 %v100
    %136 = vmatprep.subr.mxu0 0.0
    %137 = vmatpush1.msra.mxu0 %v101
    %138 = vmatprep.subr.mxu0 0.0
    %139 = vmatpush1.msra.mxu0 %v102
    %140 = vmatprep.subr.mxu0 0.0
    %141 = vmatpush1.msra.mxu0 %v103
    %142 = vmatprep.subr.mxu0 0.0
    %143 = vmatpush1.msra.mxu0 %v104
    %144 = vmatprep.subr.mxu0 0.0
    %145 = vmatpush1.msra.mxu0 0.0
    %146 = vmatprep.subr.mxu0 0.0
    %147 = vmatpush1.msra.mxu0 0.0
    %148 = vmatprep.subr.mxu0 0.0
    %149 = vmatpush1.msra.mxu0 0.0
    %150 = vmatprep.subr.mxu0 0.0
    %151 = vmatpush1.msra.mxu0 0.0
    %152 = vmatprep.subr.mxu0 0.0
    %153 = vmatpush1.msra.mxu0 0.0
    %154 = vmatprep.subr.mxu0 0.0
    %155 = vmatpush1.msra.mxu0 0.0
    %156 = vmatprep.subr.mxu0 0.0
    %157 = vmatpush1.msra.mxu0 0.0
    %158 = vmatprep.subr.mxu0 0.0
    %159 = vmatpush1.msra.mxu0 0.0
    %160 = vmatprep.subr.mxu0 0.0
    %161 = vmatpush1.msra.mxu0 0.0
    %162 = vmatprep.subr.mxu0 0.0
    %163 = vmatpush1.msra.mxu0 0.0
    %164 = vmatprep.subr.mxu0 0.0
    %165 = vmatpush1.msra.mxu0 0.0
    %166 = vmatprep.subr.mxu0 0.0
    %167 = vmatpush1.msra.mxu0 0.0
    %168 = vmatprep.subr.mxu0 0.0
    %169 = vmatpush1.msra.mxu0 0.0
    %170 = vmatprep.subr.mxu0 0.0
    %171 = vmatpush1.msra.mxu0 0.0
    %172 = vmatprep.subr.mxu0 0.0
    %173 = vmatpush1.msra.mxu0 0.0
    %174 = vmatprep.subr.mxu0 0.0
    %175 = vmatpush1.msra.mxu0 0.0
    %176 = vmatprep.mubr.f32.mxu0 0.0
    %177 = vmatmul.mubr.f32.gmra.mrb[0].mxu0 %v85
    %v178 = vpop.f32.mrb[0].mxu0
    %v179 = vadd.f32 %v110, %v178
    %v180 = vpop.f32.mrb[0].mxu0
    %181 = vmatprep.mubr.f32.mxu0 0.0
    %182 = vmatmul.mubr.f32.gmra.mrb[0].mxu0 %v86
    %v183 = vpop.f32.mrb[0].mxu0
    %v184 = vadd.f32 %v110, %v183
    %v185 = vpop.f32.mrb[0].mxu0
    %186 = vmatprep.mubr.f32.mxu0 0.0
    %187 = vmatmul.mubr.f32.gmra.mrb[0].mxu0 %v87
    %v188 = vpop.f32.mrb[0].mxu0
    %v189 = vadd.f32 %v110, %v188
    %v190 = vpop.f32.mrb[0].mxu0
    %191 = vmatprep.mubr.f32.mxu0 0.0
    %192 = vmatmul.mubr.f32.gmra.mrb[0].mxu0 %v88
    %v193 = vpop.f32.mrb[0].mxu0
    %v194 = vadd.f32 %v110, %v193
    %v195 = vpop.f32.mrb[0].mxu0
    %196 = vdwg.mxu0
    %v197 = vmax.f32 %v179, 0.0
    %v198 = vmax.f32 %v184, 0.0
    %v199 = vmax.f32 %v189, 0.0
    %v200 = vmax.f32 %v194, 0.0
    %v201 = vld [vmem:[#allocation8] sm:$0xff]
    %v202 = vld [vmem:[#allocation8 + $0x8] sm:$0xff]
    %v203 = vld [vmem:[#allocation8 + $0x10] sm:$0xff]
    %v204 = vld [vmem:[#allocation8 + $0x18] sm:$0xff]
    %v205 = vld [vmem:[#allocation8 + $0x20] sm:$0xff]
    %v206 = vld [vmem:[#allocation8 + $0x28] sm:$0xff]
    %v207 = vld [vmem:[#allocation8 + $0x30] sm:$0xff]
    %v208 = vld [vmem:[#allocation8 + $0x38] sm:$0xff]
    %v209 = vld [vmem:[#allocation8 + $0x40] sm:$0xff]
    %v210 = vld [vmem:[#allocation8 + $0x48] sm:$0xff]
    %v211 = vld [vmem:[#allocation8 + $0x50] sm:$0xff]
    %v212 = vld [vmem:[#allocation8 + $0x58] sm:$0xff]
    %v213 = vld [vmem:[#allocation8 + $0x60] sm:$0xff]
    %v214 = vld [vmem:[#allocation8 + $0x68] sm:$0xff]
    %v215 = vld [vmem:[#allocation8 + $0x70] sm:$0xff]
    %v216 = vld [vmem:[#allocation8 + $0x78] sm:$0xff]
    %v217 = vld [vmem:[#allocation10] sm:$0x1]
    %v219 = vlaneseq
    %v220 = vshrl.u32 %v219, 7
    %v221 = vsub.s32 0, %v220
    %v222 = vrot.slane %v217, %v221
    %224 = vmatprep.subr.mxu0 0.0
    %225 = vmatpush1.msra.mxu0 %v201
    %226 = vmatprep.subr.mxu0 0.0
    %227 = vmatpush1.msra.mxu0 %v202
    %228 = vmatprep.subr.mxu0 0.0
    %229 = vmatpush1.msra.mxu0 %v203
    %230 = vmatprep.subr.mxu0 0.0
    %231 = vmatpush1.msra.mxu0 %v204
    %232 = vmatprep.subr.mxu0 0.0
    %233 = vmatpush1.msra.mxu0 %v205
    %234 = vmatprep.subr.mxu0 0.0
    %235 = vmatpush1.msra.mxu0 %v206
    %236 = vmatprep.subr.mxu0 0.0
    %237 = vmatpush1.msra.mxu0 %v207
    %238 = vmatprep.subr.mxu0 0.0
    %239 = vmatpush1.msra.mxu0 %v208
    %240 = vmatprep.subr.mxu0 0.0
    %241 = vmatpush1.msra.mxu0 %v209
    %242 = vmatprep.subr.mxu0 0.0
    %243 = vmatpush1.msra.mxu0 %v210
    %244 = vmatprep.subr.mxu0 0.0
    %245 = vmatpush1.msra.mxu0 %v211
    %246 = vmatprep.subr.mxu0 0.0
    %247 = vmatpush1.msra.mxu0 %v212
    %248 = vmatprep.subr.mxu0 0.0
    %249 = vmatpush1.msra.mxu0 %v213
    %250 = vmatprep.subr.mxu0 0.0
    %251 = vmatpush1.msra.mxu0 %v214
    %252 = vmatprep.subr.mxu0 0.0
    %253 = vmatpush1.msra.mxu0 %v215
    %254 = vmatprep.subr.mxu0 0.0
    %255 = vmatpush1.msra.mxu0 %v216
    %256 = vmatprep.subr.mxu0 0.0
    %257 = vmatpush1.msra.mxu0 0.0
    %258 = vmatprep.subr.mxu0 0.0
    %259 = vmatpush1.msra.mxu0 0.0
    %260 = vmatprep.subr.mxu0 0.0
    %261 = vmatpush1.msra.mxu0 0.0
    %262 = vmatprep.subr.mxu0 0.0
    %263 = vmatpush1.msra.mxu0 0.0
    %264 = vmatprep.subr.mxu0 0.0
    %265 = vmatpush1.msra.mxu0 0.0
    %266 = vmatprep.subr.mxu0 0.0
    %267 = vmatpush1.msra.mxu0 0.0
    %268 = vmatprep.subr.mxu0 0.0
    %269 = vmatpush1.msra.mxu0 0.0
    %270 = vmatprep.subr.mxu0 0.0
    %271 = vmatpush1.msra.mxu0 0.0
    %272 = vmatprep.subr.mxu0 0.0
    %273 = vmatpush1.msra.mxu0 0.0
    %274 = vmatprep.subr.mxu0 0.0
    %275 = vmatpush1.msra.mxu0 0.0
    %276 = vmatprep.subr.mxu0 0.0
    %277 = vmatpush1.msra.mxu0 0.0
    %278 = vmatprep.subr.mxu0 0.0
    %279 = vmatpush1.msra.mxu0 0.0
    %280 = vmatprep.subr.mxu0 0.0
    %281 = vmatpush1.msra.mxu0 0.0
    %282 = vmatprep.subr.mxu0 0.0
    %283 = vmatpush1.msra.mxu0 0.0
    %284 = vmatprep.subr.mxu0 0.0
    %285 = vmatpush1.msra.mxu0 0.0
    %286 = vmatprep.subr.mxu0 0.0
    %287 = vmatpush1.msra.mxu0 0.0
    %288 = vmatprep.mubr.f32.mxu0 0.0
    %289 = vmatmul.mubr.f32.gmra.mrb[0].mxu0 %v197
    %v290 = vpop.f32.mrb[0].mxu0
    %v291 = vadd.f32 %v222, %v290
    %v292 = vpop.f32.mrb[0].mxu0
    %293 = vmatprep.mubr.f32.mxu0 0.0
    %294 = vmatmul.mubr.f32.gmra.mrb[0].mxu0 %v198
    %v295 = vpop.f32.mrb[0].mxu0
    %v296 = vadd.f32 %v222, %v295
    %v297 = vpop.f32.mrb[0].mxu0
    %298 = vmatprep.mubr.f32.mxu0 0.0
    %299 = vmatmul.mubr.f32.gmra.mrb[0].mxu0 %v199
    %v300 = vpop.f32.mrb[0].mxu0
    %v301 = vadd.f32 %v222, %v300
    %v302 = vpop.f32.mrb[0].mxu0
    %303 = vmatprep.mubr.f32.mxu0 0.0
    %304 = vmatmul.mubr.f32.gmra.mrb[0].mxu0 %v200
    %v305 = vpop.f32.mrb[0].mxu0
    %v306 = vadd.f32 %v222, %v305
    %v307 = vpop.f32.mrb[0].mxu0
    %308 = vdwg.mxu0
    %v309 = vadd.f32 %v291, %v85
    %v310 = vadd.f32 %v296, %v86
    %v311 = vadd.f32 %v301, %v87
    %v312 = vadd.f32 %v306, %v88
    %313 = vst [vmem:[#allocation11] sm:$0xff] %v309
    %314 = vst [vmem:[#allocation11 + $0x8] sm:$0xff] %v310
    %315 = vst [vmem:[#allocation11 + $0x10] sm:$0xff] %v311
    %316 = vst [vmem:[#allocation11 + $0x18] sm:$0xff] %v312
    // Predicated region
    $region42: #{tpu_custom_call.1} parent=1 // pred_check
      _
    $region43: #{tpu_custom_call.1} parent=1 // pred_check_branch
      %318 = sbr.rel (0) target = $region45
    $region44: #{tpu_custom_call.1} parent=1 // pred_region
      %s320 = ssub.s32 512, 512
      %321 = vsyncadd [#allocation4], %s320
      %s322 = sshll.u32 [#allocation11], 4
      %s323 = int_to_ptr.vmem [resolvable:$true] %s322
      %328 = dma.vmem_to_hbm [thread:$0]  %s323, 512, %s5, [#allocation4], 128, 128, 8
    $region45: #{tpu_custom_call.1} parent=1 // pred_fallthru
      _
    // Predicated region
    $region46: #{tpu_custom_call.1} parent=1 // pred_check
      _
    $region47: #{tpu_custom_call.1} parent=1 // pred_check_branch
      %330 = sbr.rel (0) target = $region49
    $region48: #{tpu_custom_call.1} parent=1 // pred_region
      %331 = dma.done [#allocation4], 512
    $region49: #{tpu_custom_call.1} parent=1 // pred_fallthru
      _
    %332 = vsyncpa [#allocation3], 1
    %333 = vsyncpa [#allocation6], 1
    %334 = vsyncpa [#allocation9], 1
    %335 = vsyncpa [#allocation4], 1

</llo_original>
